<compile_context>
chip_gen: v5e
topology: v5e:2x2
jax: 0.10.0
libtpu: 0.0.40
codegen_flags: <defaults>
</compile_context>

<pallas_src>
import jax
import jax.numpy as jnp
from jax.experimental import pallas as pl
from jax.experimental.pallas import tpu as pltpu

HIDDEN_LAYER = 70
# TODO(synk): STATE_DIM = len(TradingEnv().reset()) in the original; the env is not
# available here, so use a synthetic stand-in of 8 features.
STATE_DIM = 8

H2 = 2 * HIDDEN_LAYER        # 140 real hidden units after the concat
ONES_H_ROW = H2              # row 140 of h/q is held at 1.0 (carries b2 / b3)
H2P = 144                    # 140 + ones row + pad to a multiple of 16 (bf16)
ONES_X_ROW = STATE_DIM + 1   # packed-input row held at 1.0 (carries b1)
IN_PAD = 16                  # STATE_DIM + 1 + ones + pad -> 16 packed features
OUT_PAD = 8                  # output rows padded to a full f32 sublane set


def _cdiv(a, b):
    return (a + b - 1) // b


def _choose_tiling(B, tile_target):
    """Pick (tile_b, n_tiles, b_pad): tile_b multiple of 128, <= ~tile_target,
    >=2 tiles once B >= 256 (v7x megacore), and waste < one tile."""
    tile_target = max(int(tile_target), 128)
    chunks = _cdiv(B, 128)                       # 128-wide lane chunks of batch
    n_tiles = _cdiv(chunks * 128, tile_target)
    if chunks >= 2:
        n_tiles = max(n_tiles, 2)                # keep both v7x TensorCores busy
    n_tiles = min(n_tiles, chunks)
    chunks_per_tile = _cdiv(chunks, n_tiles)
    tile_b = chunks_per_tile * 128
    n_tiles = _cdiv(chunks, chunks_per_tile)
    return tile_b, n_tiles, tile_b * n_tiles


def qnet_kernel(x_ref, w1_ref, w2_ref, w3_ref, out_ref):
    """Feature-major MLP, biases pre-folded: x [IN_PAD, T] -> out [OUT_PAD, T]."""
    # layer 1 (fused s/p + b1): h = relu(W1 @ x)          [H2P, T], row 140 == 1
    h = jnp.maximum(
        jnp.dot(w1_ref[...], x_ref[...], preferred_element_type=jnp.float32),
        0.0).astype(jnp.bfloat16)
    # layer 2 (+ b2 via ones row): q = relu(W2 @ h)        [H2P, T], row 140 == 1
    q = jnp.maximum(
        jnp.dot(w2_ref[...], h, preferred_element_type=jnp.float32),
        0.0).astype(jnp.bfloat16)
    # layer 3 (+ b3 via ones row): out = W3 @ q            [OUT_PAD, T], row 0 real
    out_ref[...] = jnp.dot(
        w3_ref[...], q, preferred_element_type=jnp.float32).astype(out_ref.dtype)


def deterministic_q_network(s, p, kparams, tile_target=2048):
    """s: [B, STATE_DIM] f32, p: [B, 1] f32 -> q: [B, 1] f32."""
    B = s.shape[0]
    tile_b, n_tiles, b_pad = _choose_tiling(B, tile_target)

    # Pack [s | p | 1 | 0] feature-major straight into one bf16 buffer.
    x_t = jnp.zeros((IN_PAD, b_pad), jnp.bfloat16)
    x_t = x_t.at[:STATE_DIM, :B].set(s.T.astype(jnp.bfloat16))
    x_t = x_t.at[STATE_DIM, :B].set(p[:, 0].astype(jnp.bfloat16))
    x_t = x_t.at[ONES_X_ROW, :].set(jnp.bfloat16(1.0))       # bias-carrier row

    def const_spec(shape):
        # Whole array as one block, same block every grid step -> VMEM-resident.
        return pl.BlockSpec(shape, lambda i: (0, 0))

    out = pl.pallas_call(
        qnet_kernel,
        out_shape=jax.ShapeDtypeStruct((OUT_PAD, b_pad), jnp.float32),
        grid_spec=pltpu.PrefetchScalarGridSpec(
            num_scalar_prefetch=0,
            grid=(n_tiles,),
            in_specs=[
                pl.BlockSpec((IN_PAD, tile_b), lambda i: (0, i)),   # x batch tile
                const_spec((H2P, IN_PAD)),                          # W1 (+b1, ones)
                const_spec((H2P, H2P)),                             # W2 (+b2, ones)
                const_spec((OUT_PAD, H2P)),                         # W3 (+b3)
            ],
            out_specs=pl.BlockSpec((OUT_PAD, tile_b), lambda i: (0, i)),
        ),
        compiler_params=pltpu.CompilerParams(
            dimension_semantics=("parallel",),
            vmem_limit_bytes=32 * 1024 * 1024,   # working set well under v7x's 64 MiB/core
        ),
    )(x_t, kparams["w1"], kparams["w2"], kparams["w3"])

    return out[0, :B].reshape(B, 1)


def init_params(key):
    """Logical params in PyTorch nn.Linear convention: W [out, in], b [out]."""
    H, S = HIDDEN_LAYER, STATE_DIM
    ks = jax.random.split(key, 8)

    def uniform(k, shape, fan_in):
        bound = 1.0 / jnp.sqrt(jnp.float32(fan_in))
        return jax.random.uniform(k, shape, jnp.float32, -bound, bound)

    return {
        "w1s": uniform(ks[0], (H, S), S),
        "b1s": uniform(ks[1], (H,), S),
        "w1p": uniform(ks[2], (H, 1), 1),
        "b1p": uniform(ks[3], (H,), 1),
        "w2":  uniform(ks[4], (2 * H, 2 * H), 2 * H),
        "b2":  uniform(ks[5], (2 * H,), 2 * H),
        "w3":  uniform(ks[6], (1, 2 * H), 2 * H),
        "b3":  uniform(ks[7], (1,), 2 * H),
    }


def prepare_kernel_params(params):
    """One-time weight prep: fuse layer 1 (s/p) into one block matrix, fold every
    bias into a padded column via constant-1 rows, pad 140->144 / 1->8, cast bf16."""
    H, S = HIDDEN_LAYER, STATE_DIM

    # W1 [H2P, IN_PAD]: rows 0..69 = h1(s), rows 70..139 = h2(p), row 140 = ones row.
    w1 = jnp.zeros((H2P, IN_PAD), jnp.float32)
    w1 = w1.at[:H, :S].set(params["w1s"])
    w1 = w1.at[H:2 * H, S].set(params["w1p"][:, 0])
    w1 = w1.at[:H, ONES_X_ROW].set(params["b1s"])          # b1_s via x ones row
    w1 = w1.at[H:2 * H, ONES_X_ROW].set(params["b1p"])     # b1_p via x ones row
    w1 = w1.at[ONES_H_ROW, ONES_X_ROW].set(1.0)            # h[140] = relu(1) = 1

    # W2 [H2P, H2P]: cat = [h1; h2] is contiguous rows 0..139 in this layout.
    w2 = jnp.zeros((H2P, H2P), jnp.float32)
    w2 = w2.at[:2 * H, :2 * H].set(params["w2"])
    w2 = w2.at[:2 * H, ONES_H_ROW].set(params["b2"])       # b2 via h ones row
    w2 = w2.at[ONES_H_ROW, ONES_H_ROW].set(1.0)            # q[140] = relu(1) = 1

    # W3 [OUT_PAD, H2P]: row 0 is the real output, rows 1..7 are zero padding.
    w3 = jnp.zeros((OUT_PAD, H2P), jnp.float32)
    w3 = w3.at[0, :2 * H].set(params["w3"][0])
    w3 = w3.at[0, ONES_H_ROW].set(params["b3"][0])         # b3 via q ones row

    return {"w1": w1.astype(jnp.bfloat16),
            "w2": w2.astype(jnp.bfloat16),
            "w3": w3.astype(jnp.bfloat16)}


def reference_forward(s, p, params):
    h1 = jax.nn.relu(s @ params["w1s"].T + params["b1s"])
    h2 = jax.nn.relu(p @ params["w1p"].T + params["b1p"])
    cat = jnp.concatenate([h1, h2], axis=1)
    q = jax.nn.relu(cat @ params["w2"].T + params["b2"])
    return q @ params["w3"].T + params["b3"]


if __name__ == "__main__":
    key = jax.random.PRNGKey(0)
    k_s, k_p, k_params = jax.random.split(key, 3)

    B = 2
    s = jax.random.normal(k_s, (B, STATE_DIM), jnp.float32)
    p = jax.random.normal(k_p, (B, 1), jnp.float32)

    params = init_params(k_params)
    kparams = prepare_kernel_params(params)

    out = deterministic_q_network(s, p, kparams)
    out = jax.block_until_ready(out)

    ref = reference_forward(s, p, params)
    assert out.shape == (B, 1), out.shape
    # bf16 MXU inputs with f32 accumulation -> relaxed tolerance vs f32 reference.
    assert jnp.allclose(out, ref, atol=2e-2, rtol=2e-2), (out, ref)

    print("KERNEL_OK")
</pallas_src>

<mosaic_0001>
module attributes {stable_mosaic.version = 11 : i64} {
  func.func @qnet_kernel(%arg0: i32, %arg1: memref<16x128xbf16, #tpu.memory_space<vmem>>, %arg2: memref<144x16xbf16, #tpu.memory_space<vmem>>, %arg3: memref<144x144xbf16, #tpu.memory_space<vmem>>, %arg4: memref<8x144xbf16, #tpu.memory_space<vmem>>, %arg5: memref<8x128xf32, #tpu.memory_space<vmem>>) attributes {dimension_semantics = [#tpu.dimension_semantics<parallel>], iteration_bounds = array<i64: 1>, scalar_prefetch = 0 : i64, scratch_operands = 0 : i64, tpu.core_type = #tpu.core_type<tc>, window_params = [{transform_indices = @transform_0, window_bounds = array<i64: 16, 128>}, {pipeline_mode = #tpu.pipeline_mode<synchronous>, transform_indices = @transform_1, window_bounds = array<i64: 144, 16>}, {pipeline_mode = #tpu.pipeline_mode<synchronous>, transform_indices = @transform_2, window_bounds = array<i64: 144, 144>}, {pipeline_mode = #tpu.pipeline_mode<synchronous>, transform_indices = @transform_3, window_bounds = array<i64: 8, 144>}, {transform_indices = @transform_4, window_bounds = array<i64: 8, 128>}]} {
    %c0 = arith.constant 0 : index
    %c0_0 = arith.constant 0 : index
    %0 = vector.load %arg2[%c0, %c0_0] : memref<144x16xbf16, #tpu.memory_space<vmem>>, vector<144x16xbf16>
    %c0_1 = arith.constant 0 : index
    %c0_2 = arith.constant 0 : index
    %1 = vector.load %arg1[%c0_1, %c0_2] : memref<16x128xbf16, #tpu.memory_space<vmem>>, vector<16x128xbf16>
    %cst = arith.constant dense<0.000000e+00> : vector<144x128xf32>
    %2 = tpu.matmul %0, %1, %cst {dimension_numbers = #tpu.dot_dimension_numbers<[1], [0], [0], [1], [0, 0, 1, 1], [], []>} : vector<144x16xbf16>, vector<16x128xbf16>, vector<144x128xf32> -> vector<144x128xf32>
    %cst_3 = arith.constant 0.000000e+00 : f32
    %3 = vector.broadcast %cst_3 : f32 to vector<144x128xf32>
    %4 = arith.maximumf %2, %3 : vector<144x128xf32>
    %5 = arith.truncf %4 : vector<144x128xf32> to vector<144x128xbf16>
    %c0_4 = arith.constant 0 : index
    %c0_5 = arith.constant 0 : index
    %6 = vector.load %arg3[%c0_4, %c0_5] : memref<144x144xbf16, #tpu.memory_space<vmem>>, vector<144x144xbf16>
    %cst_6 = arith.constant dense<0.000000e+00> : vector<144x128xf32>
    %7 = tpu.matmul %6, %5, %cst_6 {dimension_numbers = #tpu.dot_dimension_numbers<[1], [0], [0], [1], [0, 0, 1, 1], [], []>} : vector<144x144xbf16>, vector<144x128xbf16>, vector<144x128xf32> -> vector<144x128xf32>
    %cst_7 = arith.constant 0.000000e+00 : f32
    %8 = vector.broadcast %cst_7 : f32 to vector<144x128xf32>
    %9 = arith.maximumf %7, %8 : vector<144x128xf32>
    %10 = arith.truncf %9 : vector<144x128xf32> to vector<144x128xbf16>
    %c0_8 = arith.constant 0 : index
    %c0_9 = arith.constant 0 : index
    %11 = vector.load %arg4[%c0_8, %c0_9] : memref<8x144xbf16, #tpu.memory_space<vmem>>, vector<8x144xbf16>
    %cst_10 = arith.constant dense<0.000000e+00> : vector<8x128xf32>
    %12 = tpu.matmul %11, %10, %cst_10 {dimension_numbers = #tpu.dot_dimension_numbers<[1], [0], [0], [1], [0, 0, 1, 1], [], []>} : vector<8x144xbf16>, vector<144x128xbf16>, vector<8x128xf32> -> vector<8x128xf32>
    %c0_11 = arith.constant 0 : index
    %c0_12 = arith.constant 0 : index
    %13 = vector.load %arg5[%c0_11, %c0_12] : memref<8x128xf32, #tpu.memory_space<vmem>>, vector<8x128xf32>
    tpu.vector_store %arg5[%c0_11, %c0_12], %12 {strides = array<i32>} : memref<8x128xf32, #tpu.memory_space<vmem>>, vector<8x128xf32>,
    return
  }
  func.func @transform_0(%arg0: i32) -> (i32, i32) {
    %c0_i32 = arith.constant 0 : i32
    %c0_i32_0 = arith.constant 0 : i32
    return %c0_i32, %arg0 : i32, i32
  }
  func.func @transform_1(%arg0: i32) -> (i32, i32) {
    %c0_i32 = arith.constant 0 : i32
    %c0_i32_0 = arith.constant 0 : i32
    %c0_i32_1 = arith.constant 0 : i32
    return %c0_i32, %c0_i32_0 : i32, i32
  }
  func.func @transform_2(%arg0: i32) -> (i32, i32) {
    %c0_i32 = arith.constant 0 : i32
    %c0_i32_0 = arith.constant 0 : i32
    %c0_i32_1 = arith.constant 0 : i32
    return %c0_i32, %c0_i32_0 : i32, i32
  }
  func.func @transform_3(%arg0: i32) -> (i32, i32) {
    %c0_i32 = arith.constant 0 : i32
    %c0_i32_0 = arith.constant 0 : i32
    %c0_i32_1 = arith.constant 0 : i32
    return %c0_i32, %c0_i32_0 : i32, i32
  }
  func.func @transform_4(%arg0: i32) -> (i32, i32) {
    %c0_i32 = arith.constant 0 : i32
    %c0_i32_0 = arith.constant 0 : i32
    return %c0_i32, %arg0 : i32, i32
  }
}

</mosaic_0001>

<llo_original>
// kernel: tpu_custom_call.1
$region0: #{tpu_custom_call.1}
  #allocation0 [shape = 'u32[]', space=smem, size = 0x4, offset = 0x4, fixed_abs, tag = 'smem constant byte address 0x4 - core index']
  #allocation1 [shape = 'u32[72,128]{1,0:T(1,128)}', space=vmem, size = 0x9000, scoped, tag = 'internal scratch']
  %s0 = inlined_call_operand.vmem [shape: bf16[16,128], index: 0, kind: input, shape index: {}]
  %s1 = inlined_call_operand.vmem [shape: bf16[144,16], index: 1, kind: input, shape index: {}]
  %s2 = inlined_call_operand.hbm [shape: bf16[144,144], index: 2, kind: input, shape index: {}]
  %s3 = inlined_call_operand.vmem [shape: bf16[8,144], index: 3, kind: input, shape index: {}]
  %s4 = inlined_call_operand.hbm [shape: f32[8,128], index: 4, kind: output, shape index: {}]
  %s5 = sld [smem:[#allocation0]]
  $region30: #{tpu_custom_call.1} parent=0
    _
  %s7 = ssub.s32 1, %s5
  %s8 = scalar_select 0, %s7, %s5
  $region1: #{tpu_custom_call.1} parent=0
    #allocation2 [shape = 'u8[73728]{0}', space=vmem, size = 0x12000, scoped, tag = 'input window, operand 2, single buffered']
    #allocation3 [shape = 's32[1]{0}', space=sflag, size = 0x4, scoped, tag = 'scoped memory for tpu_custom_call.1']
    #allocation4 [shape = 's32[1]{0}', space=sflag, size = 0x4, scoped, tag = 'scoped memory for tpu_custom_call.1']
    #allocation5 [shape = 'u8[4096]{0}', space=vmem, size = 0x1000, scoped, tag = 'output window, operand 0, single buffered']
    %9 = vsyncpa [#allocation3], 0
    %10 = vsyncpa [#allocation4], 0
    // Predicated region
    $region2: #{tpu_custom_call.1} parent=1 // pred_check
      _
    $region3: #{tpu_custom_call.1} parent=1 // pred_check_branch
      %12 = sbr.rel (0) target = $region5
    $region4: #{tpu_custom_call.1} parent=1 // pred_region
      _
    $region5: #{tpu_custom_call.1} parent=1 // pred_fallthru
      _
    // Predicated region
    $region6: #{tpu_custom_call.1} parent=1 // pred_check
      _
    $region7: #{tpu_custom_call.1} parent=1 // pred_check_branch
      %14 = sbr.rel (0) target = $region9
    $region8: #{tpu_custom_call.1} parent=1 // pred_region
      _
    $region9: #{tpu_custom_call.1} parent=1 // pred_fallthru
      _
    // Predicated region
    $region10: #{tpu_custom_call.1} parent=1 // pred_check
      _
    $region11: #{tpu_custom_call.1} parent=1 // pred_check_branch
      %16 = sbr.rel (0) target = $region13
    $region12: #{tpu_custom_call.1} parent=1 // pred_region
      %18 = vsyncadd [#allocation3], 0
      %s19 = sshll.u32 %s2, 4
      %s20 = int_to_ptr.hbm [resolvable:$true] %s19
      %s21 = sshll.u32 [#allocation2], 4
      %s22 = int_to_ptr.vmem [resolvable:$true] %s21
      %27 = dma.hbm_to_vmem [thread:$0]  %s20, 2304, %s22, [#allocation3], 128, 128, 8
    $region13: #{tpu_custom_call.1} parent=1 // pred_fallthru
      _
    // Predicated region
    $region14: #{tpu_custom_call.1} parent=1 // pred_check
      _
    $region15: #{tpu_custom_call.1} parent=1 // pred_check_branch
      %29 = sbr.rel (0) target = $region17
    $region16: #{tpu_custom_call.1} parent=1 // pred_region
      _
    $region17: #{tpu_custom_call.1} parent=1 // pred_fallthru
      _
    // Predicated region
    $region18: #{tpu_custom_call.1} parent=1 // pred_check
      _
    $region19: #{tpu_custom_call.1} parent=1 // pred_check_branch
      %31 = sbr.rel (0) target = $region21
    $region20: #{tpu_custom_call.1} parent=1 // pred_region
      %33 = dma.done [#allocation3], 2304
    $region21: #{tpu_custom_call.1} parent=1 // pred_fallthru
      _
    %v35 = vld [vmem:[%s1] sm:$0xf]
    %v36 = vld [vmem:[%s1 + $0x4] sm:$0xf]
    %v37 = vld [vmem:[%s1 + $0x8] sm:$0xf]
    %v38 = vld [vmem:[%s1 + $0xc] sm:$0xf]
    %v39 = vld [vmem:[%s1 + $0x10] sm:$0xf]
    %v40 = vld [vmem:[%s1 + $0x14] sm:$0xf]
    %v41 = vld [vmem:[%s1 + $0x18] sm:$0xf]
    %v42 = vld [vmem:[%s1 + $0x1c] sm:$0xf]
    %v43 = vld [vmem:[%s1 + $0x20] sm:$0xf]
    %v44 = vld [vmem:[%s1 + $0x24] sm:$0xf]
    %v45 = vld [vmem:[%s1 + $0x28] sm:$0xf]
    %v46 = vld [vmem:[%s1 + $0x2c] sm:$0xf]
    %v47 = vld [vmem:[%s1 + $0x30] sm:$0xf]
    %v48 = vld [vmem:[%s1 + $0x34] sm:$0xf]
    %v49 = vld [vmem:[%s1 + $0x38] sm:$0xf]
    %v50 = vld [vmem:[%s1 + $0x3c] sm:$0xf]
    %v51 = vld [vmem:[%s1 + $0x40] sm:$0xf]
    %v52 = vld [vmem:[%s1 + $0x44] sm:$0xf]
    %v53 = vld [vmem:[%s0] sm:$0xf]
    %v54 = vld [vmem:[%s0 + $0x4] sm:$0xf]
    %v73 = vunpack.c.l.b16 %v35
    %v74 = vunpack.c.l.b16 %v36
    %v75 = vunpack.c.l.b16 %v37
    %v76 = vunpack.c.l.b16 %v38
    %v77 = vunpack.c.l.b16 %v39
    %v78 = vunpack.c.l.b16 %v40
    %v79 = vunpack.c.l.b16 %v41
    %v80 = vunpack.c.l.b16 %v42
    %v81 = vunpack.c.l.b16 %v43
    %v82 = vunpack.c.l.b16 %v44
    %v83 = vunpack.c.l.b16 %v45
    %v84 = vunpack.c.l.b16 %v46
    %v85 = vunpack.c.l.b16 %v47
    %v86 = vunpack.c.l.b16 %v48
    %v87 = vunpack.c.l.b16 %v49
    %v88 = vunpack.c.l.b16 %v50
    %v89 = vunpack.c.l.b16 %v51
    %v90 = vunpack.c.l.b16 %v52
    %v91 = vpack.c.b16 %v74, %v73
    %v92 = vpack.c.b16 %v76, %v75
    %v93 = vpack.c.b16 %v78, %v77
    %v94 = vpack.c.b16 %v80, %v79
    %v95 = vpack.c.b16 %v82, %v81
    %v96 = vpack.c.b16 %v84, %v83
    %v97 = vpack.c.b16 %v86, %v85
    %v98 = vpack.c.b16 %v88, %v87
    %v99 = vpack.c.b16 %v90, %v89
    %v102 = vunpack.c.l.b16 %v53
    %v103 = vunpack.c.l.b16 %v54
    %v104 = vpack.c.b16 %v103, %v102
    %vm106 = vcmask 130048
    %v108 = vsel %vm106, %v91, 0
    %v111 = vsel %vm106, %v92, 0
    %v114 = vsel %vm106, %v93, 0
    %v117 = vsel %vm106, %v94, 0
    %v120 = vsel %vm106, %v95, 0
    %v123 = vsel %vm106, %v96, 0
    %v126 = vsel %vm106, %v97, 0
    %v129 = vsel %vm106, %v98, 0
    %v132 = vsel %vm106, %v99, 0
    %134 = vmatpush.bf16.msra.mxu0 0
    %135 = vmatpush.bf16.msra.mxu0 0
    %136 = vmatpush.bf16.msra.mxu0 0
    %137 = vmatpush.bf16.msra.mxu0 0
    %138 = vmatpush.bf16.msra.mxu0 0
    %139 = vmatpush.bf16.msra.mxu0 0
    %140 = vmatpush.bf16.msra.mxu0 0
    %141 = vmatpush.bf16.msra.mxu0 %v104
    %142 = vmatmul.bf16.gmra.mxu0 %v108
    %v143 = vpop.f32.mrf.mxu0
    %v144 = vadd.f32 0.0, %v143
    %v145 = vpop.f32.mrf.mxu0
    %v146 = vadd.f32 0.0, %v145
    %147 = vmatmul.bf16.gmra.mxu0 %v111
    %v148 = vpop.f32.mrf.mxu0
    %v149 = vadd.f32 0.0, %v148
    %v150 = vpop.f32.mrf.mxu0
    %v151 = vadd.f32 0.0, %v150
    %152 = vmatmul.bf16.gmra.mxu0 %v114
    %v153 = vpop.f32.mrf.mxu0
    %v154 = vadd.f32 0.0, %v153
    %v155 = vpop.f32.mrf.mxu0
    %v156 = vadd.f32 0.0, %v155
    %157 = vmatmul.bf16.gmra.mxu0 %v117
    %v158 = vpop.f32.mrf.mxu0
    %v159 = vadd.f32 0.0, %v158
    %v160 = vpop.f32.mrf.mxu0
    %v161 = vadd.f32 0.0, %v160
    %162 = vmatmul.bf16.gmra.mxu0 %v120
    %v163 = vpop.f32.mrf.mxu0
    %v164 = vadd.f32 0.0, %v163
    %v165 = vpop.f32.mrf.mxu0
    %v166 = vadd.f32 0.0, %v165
    %167 = vmatmul.bf16.gmra.mxu0 %v123
    %v168 = vpop.f32.mrf.mxu0
    %v169 = vadd.f32 0.0, %v168
    %v170 = vpop.f32.mrf.mxu0
    %v171 = vadd.f32 0.0, %v170
    %172 = vmatmul.bf16.gmra.mxu0 %v126
    %v173 = vpop.f32.mrf.mxu0
    %v174 = vadd.f32 0.0, %v173
    %v175 = vpop.f32.mrf.mxu0
    %v176 = vadd.f32 0.0, %v175
    %177 = vmatmul.bf16.gmra.mxu0 %v129
    %v178 = vpop.f32.mrf.mxu0
    %v179 = vadd.f32 0.0, %v178
    %v180 = vpop.f32.mrf.mxu0
    %v181 = vadd.f32 0.0, %v180
    %182 = vmatmul.bf16.gmra.mxu0 %v132
    %v183 = vpop.f32.mrf.mxu0
    %v184 = vadd.f32 0.0, %v183
    %v185 = vpop.f32.mrf.mxu0
    %v186 = vadd.f32 0.0, %v185
    %187 = vdwg.mxu0
    %v188 = vmax.f32 %v144, 0.0
    %v189 = vmax.f32 %v146, 0.0
    %v190 = vmax.f32 %v149, 0.0
    %v191 = vmax.f32 %v151, 0.0
    %v192 = vmax.f32 %v154, 0.0
    %v193 = vmax.f32 %v156, 0.0
    %v194 = vmax.f32 %v159, 0.0
    %v195 = vmax.f32 %v161, 0.0
    %v196 = vmax.f32 %v164, 0.0
    %v197 = vmax.f32 %v166, 0.0
    %v198 = vmax.f32 %v169, 0.0
    %v199 = vmax.f32 %v171, 0.0
    %v200 = vmax.f32 %v174, 0.0
    %v201 = vmax.f32 %v176, 0.0
    %v202 = vmax.f32 %v179, 0.0
    %v203 = vmax.f32 %v181, 0.0
    %v204 = vmax.f32 %v184, 0.0
    %v205 = vmax.f32 %v186, 0.0
    %v206 = vpack.c.bf16 %v189, %v188
    %v207 = vpack.c.bf16 %v191, %v190
    %v208 = vpack.c.bf16 %v193, %v192
    %v209 = vpack.c.bf16 %v195, %v194
    %v210 = vpack.c.bf16 %v197, %v196
    %v211 = vpack.c.bf16 %v199, %v198
    %v212 = vpack.c.bf16 %v201, %v200
    %v213 = vpack.c.bf16 %v203, %v202
    %v214 = vpack.c.bf16 %v205, %v204
    %v215 = vld [vmem:[#allocation2] sm:$0xff]
    %v216 = vld [vmem:[#allocation2 + $0x8] sm:$0xff]
    %v217 = vld [vmem:[#allocation2 + $0x10] sm:$0xff]
    %v218 = vld [vmem:[#allocation2 + $0x18] sm:$0xff]
    %v219 = vld [vmem:[#allocation2 + $0x20] sm:$0xff]
    %v220 = vld [vmem:[#allocation2 + $0x28] sm:$0xff]
    %v221 = vld [vmem:[#allocation2 + $0x30] sm:$0xff]
    %v222 = vld [vmem:[#allocation2 + $0x38] sm:$0xff]
    %v223 = vld [vmem:[#allocation2 + $0x40] sm:$0xff]
    %v224 = vld [vmem:[#allocation2 + $0x48] sm:$0xff]
    %v225 = vld [vmem:[#allocation2 + $0x50] sm:$0xff]
    %v226 = vld [vmem:[#allocation2 + $0x58] sm:$0xff]
    %v227 = vld [vmem:[#allocation2 + $0x60] sm:$0xff]
    %v228 = vld [vmem:[#allocation2 + $0x68] sm:$0xff]
    %v229 = vld [vmem:[#allocation2 + $0x70] sm:$0xff]
    %v230 = vld [vmem:[#allocation2 + $0x78] sm:$0xff]
    %v231 = vld [vmem:[#allocation2 + $0x80] sm:$0xff]
    %v232 = vld [vmem:[#allocation2 + $0x88] sm:$0xff]
    %v251 = vunpack.c.l.b16 %v215
    %v252 = vunpack.c.h.b16 %v215
    %v253 = vunpack.c.l.b16 %v216
    %v254 = vunpack.c.h.b16 %v216
    %v255 = vunpack.c.l.b16 %v217
    %v256 = vunpack.c.h.b16 %v217
    %v257 = vunpack.c.l.b16 %v218
    %v258 = vunpack.c.h.b16 %v218
    %v259 = vunpack.c.l.b16 %v219
    %v260 = vunpack.c.h.b16 %v219
    %v261 = vunpack.c.l.b16 %v220
    %v262 = vunpack.c.h.b16 %v220
    %v263 = vunpack.c.l.b16 %v221
    %v264 = vunpack.c.h.b16 %v221
    %v265 = vunpack.c.l.b16 %v222
    %v266 = vunpack.c.h.b16 %v222
    %v267 = vunpack.c.l.b16 %v223
    %v268 = vunpack.c.h.b16 %v223
    %v269 = vunpack.c.l.b16 %v224
    %v270 = vunpack.c.h.b16 %v224
    %v271 = vunpack.c.l.b16 %v225
    %v272 = vunpack.c.h.b16 %v225
    %v273 = vunpack.c.l.b16 %v226
    %v274 = vunpack.c.h.b16 %v226
    %v275 = vunpack.c.l.b16 %v227
    %v276 = vunpack.c.h.b16 %v227
    %v277 = vunpack.c.l.b16 %v228
    %v278 = vunpack.c.h.b16 %v228
    %v279 = vunpack.c.l.b16 %v229
    %v280 = vunpack.c.h.b16 %v229
    %v281 = vunpack.c.l.b16 %v230
    %v282 = vunpack.c.h.b16 %v230
    %v283 = vunpack.c.l.b16 %v231
    %v284 = vunpack.c.h.b16 %v231
    %v285 = vunpack.c.l.b16 %v232
    %v286 = vunpack.c.h.b16 %v232
    %v287 = vpack.c.b16 %v253, %v251
    %v288 = vpack.c.b16 %v254, %v252
    %v289 = vpack.c.b16 %v257, %v255
    %v290 = vpack.c.b16 %v258, %v256
    %v291 = vpack.c.b16 %v261, %v259
    %v292 = vpack.c.b16 %v262, %v260
    %v293 = vpack.c.b16 %v265, %v263
    %v294 = vpack.c.b16 %v266, %v264
    %v295 = vpack.c.b16 %v269, %v267
    %v296 = vpack.c.b16 %v270, %v268
    %v297 = vpack.c.b16 %v273, %v271
    %v298 = vpack.c.b16 %v274, %v272
    %v299 = vpack.c.b16 %v277, %v275
    %v300 = vpack.c.b16 %v278, %v276
    %v301 = vpack.c.b16 %v281, %v279
    %v302 = vpack.c.b16 %v282, %v280
    %v303 = vpack.c.b16 %v285, %v283
    %v304 = vpack.c.b16 %v286, %v284
    %v315 = vsel %vm106, %v288, 0
    %v318 = vsel %vm106, %v290, 0
    %v321 = vsel %vm106, %v292, 0
    %v324 = vsel %vm106, %v294, 0
    %v327 = vsel %vm106, %v296, 0
    %v330 = vsel %vm106, %v298, 0
    %v333 = vsel %vm106, %v300, 0
    %v336 = vsel %vm106, %v302, 0
    %v339 = vsel %vm106, %v304, 0
    %341 = vmatpush.bf16.msra.mxu0 %v213
    %342 = vmatpush.bf16.msra.mxu0 %v212
    %343 = vmatpush.bf16.msra.mxu0 %v211
    %344 = vmatpush.bf16.msra.mxu0 %v210
    %345 = vmatpush.bf16.msra.mxu0 %v209
    %346 = vmatpush.bf16.msra.mxu0 %v208
    %347 = vmatpush.bf16.msra.mxu0 %v207
    %348 = vmatpush.bf16.msra.mxu0 %v206
    %349 = vmatmul.bf16.gmra.mxu0 %v287
    %v350 = vpop.f32.mrf.mxu0
    %v351 = vadd.f32 0.0, %v350
    %v352 = vpop.f32.mrf.mxu0
    %v353 = vadd.f32 0.0, %v352
    %354 = vmatmul.bf16.gmra.mxu0 %v289
    %v355 = vpop.f32.mrf.mxu0
    %v356 = vadd.f32 0.0, %v355
    %v357 = vpop.f32.mrf.mxu0
    %v358 = vadd.f32 0.0, %v357
    %359 = vmatmul.bf16.gmra.mxu0 %v291
    %v360 = vpop.f32.mrf.mxu0
    %v361 = vadd.f32 0.0, %v360
    %v362 = vpop.f32.mrf.mxu0
    %v363 = vadd.f32 0.0, %v362
    %364 = vmatmul.bf16.gmra.mxu0 %v293
    %v365 = vpop.f32.mrf.mxu0
    %v366 = vadd.f32 0.0, %v365
    %v367 = vpop.f32.mrf.mxu0
    %v368 = vadd.f32 0.0, %v367
    %369 = vmatmul.bf16.gmra.mxu0 %v295
    %v370 = vpop.f32.mrf.mxu0
    %v371 = vadd.f32 0.0, %v370
    %v372 = vpop.f32.mrf.mxu0
    %v373 = vadd.f32 0.0, %v372
    %374 = vmatmul.bf16.gmra.mxu0 %v297
    %v375 = vpop.f32.mrf.mxu0
    %v376 = vadd.f32 0.0, %v375
    %v377 = vpop.f32.mrf.mxu0
    %v378 = vadd.f32 0.0, %v377
    %379 = vmatmul.bf16.gmra.mxu0 %v299
    %v380 = vpop.f32.mrf.mxu0
    %v381 = vadd.f32 0.0, %v380
    %v382 = vpop.f32.mrf.mxu0
    %v383 = vadd.f32 0.0, %v382
    %384 = vmatmul.bf16.gmra.mxu0 %v301
    %v385 = vpop.f32.mrf.mxu0
    %v386 = vadd.f32 0.0, %v385
    %v387 = vpop.f32.mrf.mxu0
    %v388 = vadd.f32 0.0, %v387
    %389 = vmatmul.bf16.gmra.mxu0 %v303
    %v390 = vpop.f32.mrf.mxu0
    %v391 = vadd.f32 0.0, %v390
    %v392 = vpop.f32.mrf.mxu0
    %v393 = vadd.f32 0.0, %v392
    %394 = vdwg.mxu0
    %395 = vmatpush.bf16.msra.mxu0 0
    %396 = vmatpush.bf16.msra.mxu0 0
    %397 = vmatpush.bf16.msra.mxu0 0
    %398 = vmatpush.bf16.msra.mxu0 0
    %399 = vmatpush.bf16.msra.mxu0 0
    %400 = vmatpush.bf16.msra.mxu0 0
    %401 = vmatpush.bf16.msra.mxu0 0
    %402 = vmatpush.bf16.msra.mxu0 %v214
    %403 = vmatmul.bf16.gmra.mxu0 %v315
    %v404 = vpop.f32.mrf.mxu0
    %v405 = vadd.f32 %v351, %v404
    %v406 = vpop.f32.mrf.mxu0
    %v407 = vadd.f32 %v353, %v406
    %408 = vmatmul.bf16.gmra.mxu0 %v318
    %v409 = vpop.f32.mrf.mxu0
    %v410 = vadd.f32 %v356, %v409
    %v411 = vpop.f32.mrf.mxu0
    %v412 = vadd.f32 %v358, %v411
    %413 = vmatmul.bf16.gmra.mxu0 %v321
    %v414 = vpop.f32.mrf.mxu0
    %v415 = vadd.f32 %v361, %v414
    %v416 = vpop.f32.mrf.mxu0
    %v417 = vadd.f32 %v363, %v416
    %418 = vmatmul.bf16.gmra.mxu0 %v324
    %v419 = vpop.f32.mrf.mxu0
    %v420 = vadd.f32 %v366, %v419
    %v421 = vpop.f32.mrf.mxu0
    %v422 = vadd.f32 %v368, %v421
    %423 = vmatmul.bf16.gmra.mxu0 %v327
    %v424 = vpop.f32.mrf.mxu0
    %v425 = vadd.f32 %v371, %v424
    %v426 = vpop.f32.mrf.mxu0
    %v427 = vadd.f32 %v373, %v426
    %428 = vmatmul.bf16.gmra.mxu0 %v330
    %v429 = vpop.f32.mrf.mxu0
    %v430 = vadd.f32 %v376, %v429
    %v431 = vpop.f32.mrf.mxu0
    %v432 = vadd.f32 %v378, %v431
    %433 = vmatmul.bf16.gmra.mxu0 %v333
    %v434 = vpop.f32.mrf.mxu0
    %v435 = vadd.f32 %v381, %v434
    %v436 = vpop.f32.mrf.mxu0
    %v437 = vadd.f32 %v383, %v436
    %438 = vmatmul.bf16.gmra.mxu0 %v336
    %v439 = vpop.f32.mrf.mxu0
    %v440 = vadd.f32 %v386, %v439
    %v441 = vpop.f32.mrf.mxu0
    %v442 = vadd.f32 %v388, %v441
    %443 = vmatmul.bf16.gmra.mxu0 %v339
    %v444 = vpop.f32.mrf.mxu0
    %v445 = vadd.f32 %v391, %v444
    %v446 = vpop.f32.mrf.mxu0
    %v447 = vadd.f32 %v393, %v446
    %448 = vdwg.mxu0
    %v449 = vmax.f32 %v405, 0.0
    %v450 = vmax.f32 %v407, 0.0
    %v451 = vmax.f32 %v410, 0.0
    %v452 = vmax.f32 %v412, 0.0
    %v453 = vmax.f32 %v415, 0.0
    %v454 = vmax.f32 %v417, 0.0
    %v455 = vmax.f32 %v420, 0.0
    %v456 = vmax.f32 %v422, 0.0
    %v457 = vmax.f32 %v425, 0.0
    %v458 = vmax.f32 %v427, 0.0
    %v459 = vmax.f32 %v430, 0.0
    %v460 = vmax.f32 %v432, 0.0
    %v461 = vmax.f32 %v435, 0.0
    %v462 = vmax.f32 %v437, 0.0
    %v463 = vmax.f32 %v440, 0.0
    %v464 = vmax.f32 %v442, 0.0
    %v465 = vmax.f32 %v445, 0.0
    %v466 = vmax.f32 %v447, 0.0
    %v467 = vpack.c.bf16 %v450, %v449
    %v468 = vpack.c.bf16 %v452, %v451
    %v469 = vpack.c.bf16 %v454, %v453
    %v470 = vpack.c.bf16 %v456, %v455
    %v471 = vpack.c.bf16 %v458, %v457
    %v472 = vpack.c.bf16 %v460, %v459
    %v473 = vpack.c.bf16 %v462, %v461
    %v474 = vpack.c.bf16 %v464, %v463
    %v475 = vpack.c.bf16 %v466, %v465
    %v476 = vld [vmem:[%s3] sm:$0xff]
    %v478 = vunpack.c.l.b16 %v476
    %v479 = vunpack.c.h.b16 %v476
    %v480 = vpack.c.b16 %v478, %v478
    %v481 = vpack.c.b16 %v479, %v479
    %v484 = vsel %vm106, %v481, 0
    %486 = vmatpush.bf16.msra.mxu0 %v474
    %487 = vmatpush.bf16.msra.mxu0 %v473
    %488 = vmatpush.bf16.msra.mxu0 %v472
    %489 = vmatpush.bf16.msra.mxu0 %v471
    %490 = vmatpush.bf16.msra.mxu0 %v470
    %491 = vmatpush.bf16.msra.mxu0 %v469
    %492 = vmatpush.bf16.msra.mxu0 %v468
    %493 = vmatpush.bf16.msra.mxu0 %v467
    %494 = vmatmul.bf16.gmra.mxu0 %v480
    %v495 = vpop.f32.mrf.mxu0
    %v496 = vadd.f32 0.0, %v495
    %v497 = vpop.f32.mrf.mxu0
    %498 = vdwg.mxu0
    %499 = vmatpush.bf16.msra.mxu0 0
    %500 = vmatpush.bf16.msra.mxu0 0
    %501 = vmatpush.bf16.msra.mxu0 0
    %502 = vmatpush.bf16.msra.mxu0 0
    %503 = vmatpush.bf16.msra.mxu0 0
    %504 = vmatpush.bf16.msra.mxu0 0
    %505 = vmatpush.bf16.msra.mxu0 0
    %506 = vmatpush.bf16.msra.mxu0 %v475
    %507 = vmatmul.bf16.gmra.mxu0 %v484
    %v508 = vpop.f32.mrf.mxu0
    %v509 = vadd.f32 %v496, %v508
    %v510 = vpop.f32.mrf.mxu0
    %511 = vdwg.mxu0
    %512 = vst [vmem:[#allocation5] sm:$0xff] %v509
    // Predicated region
    $region22: #{tpu_custom_call.1} parent=1 // pred_check
      _
    $region23: #{tpu_custom_call.1} parent=1 // pred_check_branch
      %514 = sbr.rel (0) target = $region25
    $region24: #{tpu_custom_call.1} parent=1 // pred_region
      %516 = vsyncadd [#allocation4], 0
      %s518 = sshll.u32 [#allocation5], 4
      %s519 = int_to_ptr.vmem [resolvable:$true] %s518
      %s520 = sshll.u32 %s4, 4
      %s521 = int_to_ptr.hbm [resolvable:$true] %s520
      %523 = dma.vmem_to_hbm [thread:$0]  %s519, 128, %s521, [#allocation4]
    $region25: #{tpu_custom_call.1} parent=1 // pred_fallthru
      _
    // Predicated region
    $region26: #{tpu_custom_call.1} parent=1 // pred_check
      _
    $region27: #{tpu_custom_call.1} parent=1 // pred_check_branch
      %525 = sbr.rel (0) target = $region29
    $region28: #{tpu_custom_call.1} parent=1 // pred_region
      %527 = dma.done [#allocation4], 128
    $region29: #{tpu_custom_call.1} parent=1 // pred_fallthru
      _
    %528 = vsyncpa [#allocation3], 1
    %529 = vsyncpa [#allocation4], 1

</llo_original>
